<compile_context>
chip_gen: v7x
topology: tpu7x:2x2x1
jax: 0.10.0
libtpu: 0.0.40
codegen_flags: <defaults>
</compile_context>

<pallas_src>
import jax
import jax.numpy as jnp
from jax.experimental import pallas as pl
from jax.experimental.pallas import tpu as pltpu


def _linear_kernel(x_ref, w_ref, b_ref, o_ref):
    # x_ref: (TB, D)        VMEM batch tile
    # w_ref: (1, D)         VMEM, resident across the whole grid
    # b_ref: (1,)           SMEM scalar bias (f32)
    # o_ref: (TB//128, 128) VMEM lane-dense output tile; batch row r of the
    #                       tile lands at (r // 128, r % 128).
    rows, lanes = o_ref.shape                        # static: (TB//128, 128)
    d = x_ref.shape[-1]
    # Split of the second-minor dim at a multiple of the sublane packing
    # (128 % {8,16,32} == 0) -> cheap reshape, no relayout of the stream.
    x = x_ref[...].astype(jnp.float32).reshape(rows, lanes, d)
    w = w_ref[...].astype(jnp.float32)               # (1, D) broadcasts over rows/lanes
    acc = jnp.sum(x * w, axis=-1)                    # VPU mul + lane reduce -> (rows, 128)
    o_ref[...] = (acc + b_ref[0]).astype(o_ref.dtype)


def _vmem_config():
    """(vmem_limit_bytes, per-buffer x-tile byte budget) per TPU generation."""
    try:
        kind = jax.devices()[0].device_kind.lower()
    except Exception:
        kind = ""
    if "v5" in kind or "v6" in kind:
        # v5e / v6e: 128 MiB physical VMEM -> bigger tiles, fewer grid steps.
        return 64 * 1024 * 1024, 24 * 1024 * 1024
    # v7x (64 MiB / TC) and unknown generations: stay conservative.
    return 32 * 1024 * 1024, 10 * 1024 * 1024


def _choose_batch_tile(B, D, itemsize, x_buf_budget):
    """Batch tile: multiple of 128 rows (lane-dense output; also satisfies any
    dtype's sublane packing), sized so one x tile (with D lane-padded to a
    multiple of 128) plus its output tile fits the per-buffer budget.
    Double-buffering of x + out stays well under the scoped VMEM limit."""
    d_pad = ((D + 127) // 128) * 128                 # lane-padded row width
    bytes_per_row = (d_pad + 1) * itemsize           # x row + its output element
    max_rows = max(128, (x_buf_budget // bytes_per_row) // 128 * 128)
    b128 = ((B + 127) // 128) * 128
    tb = min(b128, max_rows)
    if b128 >= 256:
        # Keep at least two tiles so v7x's two TensorCores both get work.
        half = ((b128 // 128 + 1) // 2) * 128
        tb = min(tb, half)
    # Note: for extremely wide D (single 128-row tile over budget) a second
    # "arbitrary" grid axis over D with a VMEM accumulator would be better;
    # not needed for typical logistic-regression feature widths.
    return tb


def lrmodel_forward(x, weight, bias):
    """Pallas equivalent of lrmodel.forward: nn.Linear(input_dim, 1)(x)."""
    B, D = x.shape
    itemsize = jnp.dtype(x.dtype).itemsize
    vmem_limit, x_buf_budget = _vmem_config()
    tb = _choose_batch_tile(B, D, itemsize, x_buf_budget)

    num_tiles = pl.cdiv(B, tb)      # ragged tail handled by Pallas boundary masking
    out_rows = pl.cdiv(B, 128)      # lane-dense output: batch row b -> (b // 128, b % 128)

    bias_f32 = bias.astype(jnp.float32).reshape(1)

    out = pl.pallas_call(
        _linear_kernel,
        out_shape=jax.ShapeDtypeStruct((out_rows, 128), x.dtype),
        grid=(num_tiles,),
        in_specs=[
            pl.BlockSpec((tb, D), lambda i: (i, 0)),            # x: streamed batch tiles
            pl.BlockSpec((1, D), lambda i: (0, 0)),             # weight: resident
            pl.BlockSpec(memory_space=pltpu.MemorySpace.SMEM),  # bias: SMEM scalar
        ],
        out_specs=pl.BlockSpec((tb // 128, 128), lambda i: (i, 0)),
        compiler_params=pltpu.CompilerParams(
            dimension_semantics=("parallel",),   # shard batch tiles across TCs (v7x)
            vmem_limit_bytes=vmem_limit,
        ),
        cost_estimate=pl.CostEstimate(
            flops=2 * B * D,
            transcendentals=0,
            bytes_accessed=itemsize * (B * D + D + B) + 4,
        ),
    )(x, weight, bias_f32)

    # Row-major flatten of (out_rows, 128) restores batch order; drop padding.
    return out.reshape(-1, 1)[:B]


if __name__ == "__main__":
    key = jax.random.PRNGKey(0)
    k_x, k_w, k_b = jax.random.split(key, 3)

    B, D = 8, 32  # batch=8, input_dim=32

    x = jax.random.normal(k_x, (B, D), dtype=jnp.float32)
    # Deterministic init mimicking nn.Linear's uniform(-1/sqrt(D), 1/sqrt(D))
    bound = 1.0 / (D ** 0.5)
    weight = jax.random.uniform(k_w, (1, D), minval=-bound, maxval=bound,
                                dtype=jnp.float32)
    bias = jax.random.uniform(k_b, (1,), minval=-bound, maxval=bound,
                              dtype=jnp.float32)

    out = lrmodel_forward(x, weight, bias)
    out = jax.block_until_ready(out)

    # Reference check in plain JAX
    ref = x @ weight.T + bias
    assert out.shape == (B, 1)
    assert jnp.allclose(out, ref, atol=1e-5, rtol=1e-5)

    print("KERNEL_OK")
</pallas_src>

<mosaic_0001>
module attributes {stable_mosaic.version = 11 : i64} {
  func.func @_linear_kernel(%arg0: i32, %arg1: memref<128x32xf32, #tpu.memory_space<vmem>>, %arg2: memref<1x32xf32, #tpu.memory_space<vmem>>, %arg3: memref<1xf32, #tpu.memory_space<smem>>, %arg4: memref<1x128xf32, #tpu.memory_space<vmem>>) attributes {dimension_semantics = [#tpu.dimension_semantics<parallel>], iteration_bounds = array<i64: 1>, scalar_prefetch = 0 : i64, scratch_operands = 0 : i64, tpu.core_type = #tpu.core_type<tc>, window_params = [{transform_indices = @transform_0, window_bounds = array<i64: 128, 32>}, {pipeline_mode = #tpu.pipeline_mode<synchronous>, transform_indices = @transform_1, window_bounds = array<i64: 1, 32>}, {transform_indices = @transform_2, window_bounds = array<i64: 1>}, {transform_indices = @transform_3, window_bounds = array<i64: 1, 128>}]} {
    %c0 = arith.constant 0 : index
    %c0_0 = arith.constant 0 : index
    %0 = vector.load %arg1[%c0, %c0_0] : memref<128x32xf32, #tpu.memory_space<vmem>>, vector<128x32xf32>
    %1 = vector.shape_cast %0 : vector<128x32xf32> to vector<1x128x32xf32>
    %c0_1 = arith.constant 0 : index
    %c0_2 = arith.constant 0 : index
    %2 = vector.load %arg2[%c0_1, %c0_2] : memref<1x32xf32, #tpu.memory_space<vmem>>, vector<1x32xf32>
    %3 = vector.shape_cast %2 : vector<1x32xf32> to vector<1x1x32xf32>
    %4 = vector.broadcast %3 : vector<1x1x32xf32> to vector<1x128x32xf32>
    %5 = arith.mulf %1, %4 : vector<1x128x32xf32>
    %cst = arith.constant dense<0.000000e+00> : vector<1x128xf32>
    %6 = vector.multi_reduction <add>, %5, %cst [2] : vector<1x128x32xf32> to vector<1x128xf32>
    %c0_3 = arith.constant 0 : index
    %7 = memref.load %arg3[%c0_3] : memref<1xf32, #tpu.memory_space<smem>>
    %8 = vector.broadcast %7 : f32 to vector<1x128xf32>
    %9 = arith.addf %6, %8 : vector<1x128xf32>
    %c0_4 = arith.constant 0 : index
    %c0_5 = arith.constant 0 : index
    %10 = vector.load %arg4[%c0_4, %c0_5] : memref<1x128xf32, #tpu.memory_space<vmem>>, vector<1x128xf32>
    tpu.vector_store %arg4[%c0_4, %c0_5], %9 {strides = array<i32>} : memref<1x128xf32, #tpu.memory_space<vmem>>, vector<1x128xf32>,
    return
  }
  func.func @transform_0(%arg0: i32) -> (i32, i32) {
    %c0_i32 = arith.constant 0 : i32
    %c0_i32_0 = arith.constant 0 : i32
    return %arg0, %c0_i32 : i32, i32
  }
  func.func @transform_1(%arg0: i32) -> (i32, i32) {
    %c0_i32 = arith.constant 0 : i32
    %c0_i32_0 = arith.constant 0 : i32
    %c0_i32_1 = arith.constant 0 : i32
    return %c0_i32, %c0_i32_0 : i32, i32
  }
  func.func @transform_2(%arg0: i32) -> i32 {
    %c0_i32 = arith.constant 0 : i32
    %c0_i32_0 = arith.constant 0 : i32
    return %c0_i32 : i32
  }
  func.func @transform_3(%arg0: i32) -> (i32, i32) {
    %c0_i32 = arith.constant 0 : i32
    %c0_i32_0 = arith.constant 0 : i32
    return %arg0, %c0_i32 : i32, i32
  }
}

</mosaic_0001>

<llo_original>
// kernel: tpu_custom_call.1
$region0: #{tpu_custom_call.1}
  #allocation0 [shape = 'u32[]', space=smem, size = 0x4, offset = 0x4, fixed_abs, tag = 'smem constant byte address 0x4 - core index']
  #allocation1 [shape = 'u32[144,128]{1,0:T(1,128)}', space=vmem, size = 0x12000, scoped, tag = 'internal scratch']
  #allocation2 [shape = 'f32[1]{0:T(128)S(6)}', space=smem, size = 0x200, scoped, tag = 'scoped memory for tpu_custom_call.1']
  %s0 = inlined_call_operand.hbm [shape: f32[8,32], index: 0, kind: input, shape index: {}]
  %s1 = inlined_call_operand.vmem [shape: f32[1,32], index: 1, kind: input, shape index: {}]
  %s2 = inlined_call_operand.<no memory space> [shape: f32[1], index: 2, kind: input, shape index: {}]
  %s3 = inlined_call_operand.hbm [shape: f32[1,128], index: 3, kind: output, shape index: {}]
  %s4 = sld [smem:[#allocation0]]
  $region26: #{tpu_custom_call.1} parent=0
    _
  %s6 = ssub.s32 1, %s4
  %s7 = scalar_select 0, %s6, %s4
  %8 = sst [smem:[#allocation2]] %s2
  $region1: #{tpu_custom_call.1} parent=0
    #allocation3 [shape = 'u8[65536]{0}', space=vmem, size = 0x10000, scoped, tag = 'input window, operand 0, single buffered']
    #allocation4 [shape = 's32[1]{0}', space=sflag, size = 0x4, scoped, tag = 'scoped memory for tpu_custom_call.1']
    #allocation5 [shape = 's32[1]{0}', space=sflag, size = 0x4, scoped, tag = 'scoped memory for tpu_custom_call.1']
    #allocation6 [shape = 'u8[512]{0}', space=vmem, size = 0x400, scoped, tag = 'output window, operand 0, single buffered']
    %9 = vsyncpa [#allocation4], 0
    %10 = vsyncpa [#allocation5], 0
    // Predicated region
    $region2: #{tpu_custom_call.1} parent=1 // pred_check
      _
    $region3: #{tpu_custom_call.1} parent=1 // pred_check_branch
      %12 = sbr.rel (0) target = $region5
    $region4: #{tpu_custom_call.1} parent=1 // pred_region
      %s14 = ssub.s32 2048, 128
      %15 = vsyncadd [#allocation4], %s14
      %s16 = sshll.u32 [#allocation3], 4
      %s17 = int_to_ptr.vmem [resolvable:$true] %s16
      %22 = dma.hbm_to_vmem [thread:$0]  %s0, 128, %s17, [#allocation4], 128, 128, 8
    $region5: #{tpu_custom_call.1} parent=1 // pred_fallthru
      _
    // Predicated region
    $region6: #{tpu_custom_call.1} parent=1 // pred_check
      _
    $region7: #{tpu_custom_call.1} parent=1 // pred_check_branch
      %24 = sbr.rel (0) target = $region9
    $region8: #{tpu_custom_call.1} parent=1 // pred_region
      _
    $region9: #{tpu_custom_call.1} parent=1 // pred_fallthru
      _
    // Predicated region
    $region10: #{tpu_custom_call.1} parent=1 // pred_check
      _
    $region11: #{tpu_custom_call.1} parent=1 // pred_check_branch
      %26 = sbr.rel (0) target = $region13
    $region12: #{tpu_custom_call.1} parent=1 // pred_region
      _
    $region13: #{tpu_custom_call.1} parent=1 // pred_fallthru
      _
    // Predicated region
    $region14: #{tpu_custom_call.1} parent=1 // pred_check
      _
    $region15: #{tpu_custom_call.1} parent=1 // pred_check_branch
      %28 = sbr.rel (0) target = $region17
    $region16: #{tpu_custom_call.1} parent=1 // pred_region
      %29 = dma.done [#allocation4], 2048
    $region17: #{tpu_custom_call.1} parent=1 // pred_fallthru
      _
    %v30 = vld [vmem:[#allocation3] sm:$0xff]
    %v31 = vld [vmem:[#allocation3 + $0x8] sm:$0xff]
    %v32 = vld [vmem:[#allocation3 + $0x10] sm:$0xff]
    %v33 = vld [vmem:[#allocation3 + $0x18] sm:$0xff]
    %v34 = vld [vmem:[#allocation3 + $0x20] sm:$0xff]
    %v35 = vld [vmem:[#allocation3 + $0x28] sm:$0xff]
    %v36 = vld [vmem:[#allocation3 + $0x30] sm:$0xff]
    %v37 = vld [vmem:[#allocation3 + $0x38] sm:$0xff]
    %v38 = vld [vmem:[#allocation3 + $0x40] sm:$0xff]
    %v39 = vld [vmem:[#allocation3 + $0x48] sm:$0xff]
    %v40 = vld [vmem:[#allocation3 + $0x50] sm:$0xff]
    %v41 = vld [vmem:[#allocation3 + $0x58] sm:$0xff]
    %v42 = vld [vmem:[#allocation3 + $0x60] sm:$0xff]
    %v43 = vld [vmem:[#allocation3 + $0x68] sm:$0xff]
    %v44 = vld [vmem:[#allocation3 + $0x70] sm:$0xff]
    %v45 = vld [vmem:[#allocation3 + $0x78] sm:$0xff]
    %v46 = vld [vmem:[%s1] sm:$0x1]
    %v48 = vlaneseq
    %v49 = vshrl.u32 %v48, 7
    %v50 = vsub.s32 0, %v49
    %v51 = vrot.slane %v46, %v50
    %v53 = vmul.f32 %v30, %v51
    %v54 = vmul.f32 %v31, %v51
    %v55 = vmul.f32 %v32, %v51
    %v56 = vmul.f32 %v33, %v51
    %v57 = vmul.f32 %v34, %v51
    %v58 = vmul.f32 %v35, %v51
    %v59 = vmul.f32 %v36, %v51
    %v60 = vmul.f32 %v37, %v51
    %v61 = vmul.f32 %v38, %v51
    %v62 = vmul.f32 %v39, %v51
    %v63 = vmul.f32 %v40, %v51
    %v64 = vmul.f32 %v41, %v51
    %v65 = vmul.f32 %v42, %v51
    %v66 = vmul.f32 %v43, %v51
    %v67 = vmul.f32 %v44, %v51
    %v68 = vmul.f32 %v45, %v51
    %vm69 = vcmask 261120
    %v70 = vsel %vm69, %v53, 0.0
    %71 = vadd.xlane.f32.xlu0 %v70
    %v72 = vpop.xlane.xlu0 %71
    %v73 = vsel %vm69, %v54, 0.0
    %74 = vadd.xlane.f32.xlu0 %v73
    %v75 = vpop.xlane.xlu0 %74
    %v76 = vsel %vm69, %v55, 0.0
    %77 = vadd.xlane.f32.xlu0 %v76
    %v78 = vpop.xlane.xlu0 %77
    %v79 = vsel %vm69, %v56, 0.0
    %80 = vadd.xlane.f32.xlu0 %v79
    %v81 = vpop.xlane.xlu0 %80
    %v82 = vsel %vm69, %v57, 0.0
    %83 = vadd.xlane.f32.xlu0 %v82
    %v84 = vpop.xlane.xlu0 %83
    %v85 = vsel %vm69, %v58, 0.0
    %86 = vadd.xlane.f32.xlu0 %v85
    %v87 = vpop.xlane.xlu0 %86
    %v88 = vsel %vm69, %v59, 0.0
    %89 = vadd.xlane.f32.xlu0 %v88
    %v90 = vpop.xlane.xlu0 %89
    %v91 = vsel %vm69, %v60, 0.0
    %92 = vadd.xlane.f32.xlu0 %v91
    %v93 = vpop.xlane.xlu0 %92
    %v94 = vsel %vm69, %v61, 0.0
    %95 = vadd.xlane.f32.xlu0 %v94
    %v96 = vpop.xlane.xlu0 %95
    %v97 = vsel %vm69, %v62, 0.0
    %98 = vadd.xlane.f32.xlu0 %v97
    %v99 = vpop.xlane.xlu0 %98
    %v100 = vsel %vm69, %v63, 0.0
    %101 = vadd.xlane.f32.xlu0 %v100
    %v102 = vpop.xlane.xlu0 %101
    %v103 = vsel %vm69, %v64, 0.0
    %104 = vadd.xlane.f32.xlu0 %v103
    %v105 = vpop.xlane.xlu0 %104
    %v106 = vsel %vm69, %v65, 0.0
    %107 = vadd.xlane.f32.xlu0 %v106
    %v108 = vpop.xlane.xlu0 %107
    %v109 = vsel %vm69, %v66, 0.0
    %110 = vadd.xlane.f32.xlu0 %v109
    %v111 = vpop.xlane.xlu0 %110
    %v112 = vsel %vm69, %v67, 0.0
    %113 = vadd.xlane.f32.xlu0 %v112
    %v114 = vpop.xlane.xlu0 %113
    %v115 = vsel %vm69, %v68, 0.0
    %116 = vadd.xlane.f32.xlu0 %v115
    %v117 = vpop.xlane.xlu0 %116
    %s118 = sld [smem:[#allocation2]]
    %v119 = vstv %s118
    %v120 = vadd.f32 %v72, %v119
    %v121 = vadd.f32 %v75, %v119
    %v122 = vadd.f32 %v78, %v119
    %v123 = vadd.f32 %v81, %v119
    %v124 = vadd.f32 %v84, %v119
    %v125 = vadd.f32 %v87, %v119
    %v126 = vadd.f32 %v90, %v119
    %v127 = vadd.f32 %v93, %v119
    %v128 = vadd.f32 %v96, %v119
    %v129 = vadd.f32 %v99, %v119
    %v130 = vadd.f32 %v102, %v119
    %v131 = vadd.f32 %v105, %v119
    %v132 = vadd.f32 %v108, %v119
    %v133 = vadd.f32 %v111, %v119
    %v134 = vadd.f32 %v114, %v119
    %v135 = vadd.f32 %v117, %v119
    %v152 = vlaneseq
    %v153 = vand.u32 %v152, 127
    %v154 = vlaneseq
    %v155 = vshrl.u32 %v154, 7
    %v156 = vsub.s32 %v153, %v155
    %v157 = vrot.slane %v120, %v156
    %v158 = vadd.s32 %v153, 4294967288
    %v159 = vlaneseq
    %v160 = vshrl.u32 %v159, 7
    %v161 = vsub.s32 %v158, %v160
    %v162 = vrot.slane %v121, %v161
    %vm163 = vcmask 130112
    %v164 = vsel %vm163, %v162, %v157
    %v165 = vadd.s32 %v153, 4294967280
    %v166 = vlaneseq
    %v167 = vshrl.u32 %v166, 7
    %v168 = vsub.s32 %v165, %v167
    %v169 = vrot.slane %v122, %v168
    %vm170 = vcmask 195712
    %v171 = vsel %vm170, %v169, %v164
    %v172 = vadd.s32 %v153, 4294967272
    %v173 = vlaneseq
    %v174 = vshrl.u32 %v173, 7
    %v175 = vsub.s32 %v172, %v174
    %v176 = vrot.slane %v123, %v175
    %vm177 = vcmask 261312
    %v178 = vsel %vm177, %v176, %v171
    %v179 = vadd.s32 %v153, 4294967264
    %v180 = vlaneseq
    %v181 = vshrl.u32 %v180, 7
    %v182 = vsub.s32 %v179, %v181
    %v183 = vrot.slane %v124, %v182
    %vm184 = vcmask 326912
    %v185 = vsel %vm184, %v183, %v178
    %v186 = vadd.s32 %v153, 4294967256
    %v187 = vlaneseq
    %v188 = vshrl.u32 %v187, 7
    %v189 = vsub.s32 %v186, %v188
    %v190 = vrot.slane %v125, %v189
    %vm191 = vcmask 392512
    %v192 = vsel %vm191, %v190, %v185
    %v193 = vadd.s32 %v153, 4294967248
    %v194 = vlaneseq
    %v195 = vshrl.u32 %v194, 7
    %v196 = vsub.s32 %v193, %v195
    %v197 = vrot.slane %v126, %v196
    %vm198 = vcmask 458112
    %v199 = vsel %vm198, %v197, %v192
    %v200 = vadd.s32 %v153, 4294967240
    %v201 = vlaneseq
    %v202 = vshrl.u32 %v201, 7
    %v203 = vsub.s32 %v200, %v202
    %v204 = vrot.slane %v127, %v203
    %vm205 = vcmask 523712
    %v206 = vsel %vm205, %v204, %v199
    %v207 = vadd.s32 %v153, 4294967232
    %v208 = vlaneseq
    %v209 = vshrl.u32 %v208, 7
    %v210 = vsub.s32 %v207, %v209
    %v211 = vrot.slane %v128, %v210
    %vm212 = vcmask 589312
    %v213 = vsel %vm212, %v211, %v206
    %v214 = vadd.s32 %v153, 4294967224
    %v215 = vlaneseq
    %v216 = vshrl.u32 %v215, 7
    %v217 = vsub.s32 %v214, %v216
    %v218 = vrot.slane %v129, %v217
    %vm219 = vcmask 654912
    %v220 = vsel %vm219, %v218, %v213
    %v221 = vadd.s32 %v153, 4294967216
    %v222 = vlaneseq
    %v223 = vshrl.u32 %v222, 7
    %v224 = vsub.s32 %v221, %v223
    %v225 = vrot.slane %v130, %v224
    %vm226 = vcmask 720512
    %v227 = vsel %vm226, %v225, %v220
    %v228 = vadd.s32 %v153, 4294967208
    %v229 = vlaneseq
    %v230 = vshrl.u32 %v229, 7
    %v231 = vsub.s32 %v228, %v230
    %v232 = vrot.slane %v131, %v231
    %vm233 = vcmask 786112
    %v234 = vsel %vm233, %v232, %v227
    %v235 = vadd.s32 %v153, 4294967200
    %v236 = vlaneseq
    %v237 = vshrl.u32 %v236, 7
    %v238 = vsub.s32 %v235, %v237
    %v239 = vrot.slane %v132, %v238
    %vm240 = vcmask 851712
    %v241 = vsel %vm240, %v239, %v234
    %v242 = vadd.s32 %v153, 4294967192
    %v243 = vlaneseq
    %v244 = vshrl.u32 %v243, 7
    %v245 = vsub.s32 %v242, %v244
    %v246 = vrot.slane %v133, %v245
    %vm247 = vcmask 917312
    %v248 = vsel %vm247, %v246, %v241
    %v249 = vadd.s32 %v153, 4294967184
    %v250 = vlaneseq
    %v251 = vshrl.u32 %v250, 7
    %v252 = vsub.s32 %v249, %v251
    %v253 = vrot.slane %v134, %v252
    %vm254 = vcmask 982912
    %v255 = vsel %vm254, %v253, %v248
    %v256 = vadd.s32 %v153, 4294967176
    %v257 = vlaneseq
    %v258 = vshrl.u32 %v257, 7
    %v259 = vsub.s32 %v256, %v258
    %v260 = vrot.slane %v135, %v259
    %vm261 = vcmask 1048512
    %v262 = vsel %vm261, %v260, %v255
    %264 = vst [vmem:[#allocation6] sm:$0x1] %v262
    // Predicated region
    $region18: #{tpu_custom_call.1} parent=1 // pred_check
      _
    $region19: #{tpu_custom_call.1} parent=1 // pred_check_branch
      %266 = sbr.rel (0) target = $region21
    $region20: #{tpu_custom_call.1} parent=1 // pred_region
      %s268 = ssub.s32 16, 16
      %269 = vsyncadd [#allocation5], %s268
      %s271 = sshll.u32 [#allocation6], 4
      %s272 = int_to_ptr.vmem [resolvable:$true] %s271
      %274 = dma.vmem_to_hbm [thread:$0]  %s272, 16, %s3, [#allocation5]
    $region21: #{tpu_custom_call.1} parent=1 // pred_fallthru
      _
    // Predicated region
    $region22: #{tpu_custom_call.1} parent=1 // pred_check
      _
    $region23: #{tpu_custom_call.1} parent=1 // pred_check_branch
      %276 = sbr.rel (0) target = $region25
    $region24: #{tpu_custom_call.1} parent=1 // pred_region
      %277 = dma.done [#allocation5], 16
    $region25: #{tpu_custom_call.1} parent=1 // pred_fallthru
      _
    %278 = vsyncpa [#allocation4], 1
    %279 = vsyncpa [#allocation5], 1

</llo_original>
